<compile_context>
chip_gen: v6e
topology: v6e:2x2x1
jax: 0.10.0
libtpu: 0.0.40
codegen_flags: <defaults>
</compile_context>

<pallas_src>
import jax
import jax.numpy as jnp
from jax.experimental import pallas as pl
from jax.experimental.pallas import tpu as pltpu


def res_autoencoder_kernel(x_ref,
                           w1_ref, b1_ref,
                           w2_ref, b2_ref,
                           w3_ref, b3_ref,
                           w4_ref, b4_ref,
                           o_ref):
    # Fused hot path: 4 matmuls (MXU, bf16 operands / f32 accum) + 2 tanh (EUP)
    # + bias adds and residual (VPU, f32).
    x_f32 = x_ref[...].astype(jnp.float32)
    mm_dtype = w1_ref.dtype  # bfloat16 (set by the wrapper)

    # Encoder
    h1 = jnp.tanh(
        jnp.dot(x_f32.astype(mm_dtype), w1_ref[...],
                preferred_element_type=jnp.float32) + b1_ref[...])
    z = jnp.dot(h1.astype(mm_dtype), w2_ref[...],
                preferred_element_type=jnp.float32) + b2_ref[...]

    # Decoder
    h2 = jnp.tanh(
        jnp.dot(z.astype(mm_dtype), w3_ref[...],
                preferred_element_type=jnp.float32) + b3_ref[...])
    out = jnp.dot(h2.astype(mm_dtype), w4_ref[...],
                  preferred_element_type=jnp.float32) + b4_ref[...]

    # Residual connection
    o_ref[...] = (out + x_f32).astype(o_ref.dtype)


def _round_up(n, m):
    return ((n + m - 1) // m) * m


def res_autoencoder_forward(x, params, dim, *, row_tile=512,
                            matmul_dtype=jnp.bfloat16):
    """x: any shape whose elements flatten to rows of `dim` (like x.view(-1, dim))."""
    x2d = x.reshape(-1, dim)
    rows = x2d.shape[0]

    # Effective row tile: multiple of 8 (sublane), capped so the grid keeps at
    # least 2 steps when there is enough work (v7x has 2 TensorCores per chip).
    tile = max(8, min(row_tile, _round_up(max(rows // 2, 1), 8)))
    padded_rows = _round_up(rows, tile)
    if padded_rows != rows:
        x2d = jnp.pad(x2d, ((0, padded_rows - rows), (0, 0)))

    (w1, b1), (w2, b2), (w3, b3), (w4, b4) = params
    d0 = dim
    d1 = w1.shape[1]  # dim + theta
    d2 = w2.shape[1]  # dim + 2*theta

    # Weights only feed the MXU -> narrow them once here; biases stay f32.
    w1m, w2m, w3m, w4m = (w.astype(matmul_dtype) for w in (w1, w2, w3, w4))
    b1f, b2f, b3f, b4f = (b.astype(jnp.float32) for b in (b1, b2, b3, b4))

    grid = (padded_rows // tile,)

    def full(shape):
        # Weight / bias blocks are identical for every grid step (constant
        # index_map -> no re-DMA across steps).
        return pl.BlockSpec(shape, lambda i: (0, 0))

    # VMEM budget: double-buffered x/out tiles + weights/biases + f32 intermediates.
    weight_bytes = sum(int(w.size) * w.dtype.itemsize for w in (w1m, w2m, w3m, w4m))
    bias_bytes = sum(int(b.size) * 4 for b in (b1f, b2f, b3f, b4f))
    io_bytes = 2 * tile * d0 * x2d.dtype.itemsize          # x tile + out tile
    interm_bytes = tile * (d1 + d2 + d1 + d0) * 4           # f32 intermediates
    vmem_needed = 2 * (io_bytes + weight_bytes + bias_bytes) + 2 * interm_bytes
    # Generous headroom, but stay well under v7x's 64 MiB physical VMEM.
    vmem_limit = int(min(max(2 * vmem_needed + (8 << 20), 32 << 20), 48 << 20))

    flops = 2 * padded_rows * (d0 * d1 + d1 * d2 + d2 * d1 + d1 * d0)
    transcendentals = padded_rows * 2 * d1
    bytes_accessed = (2 * padded_rows * d0 * x2d.dtype.itemsize
                      + weight_bytes + bias_bytes)

    out = pl.pallas_call(
        res_autoencoder_kernel,
        out_shape=jax.ShapeDtypeStruct((padded_rows, d0), x2d.dtype),
        grid_spec=pltpu.PrefetchScalarGridSpec(
            num_scalar_prefetch=0,
            grid=grid,
            in_specs=[
                pl.BlockSpec((tile, d0), lambda i: (i, 0)),   # x tile
                full((d0, d1)), full((1, d1)),                # encoder Linear 1
                full((d1, d2)), full((1, d2)),                # encoder Linear 2
                full((d2, d1)), full((1, d1)),                # decoder Linear 1
                full((d1, d0)), full((1, d0)),                # decoder Linear 2
            ],
            out_specs=pl.BlockSpec((tile, d0), lambda i: (i, 0)),
        ),
        compiler_params=pltpu.CompilerParams(
            dimension_semantics=("parallel",),
            vmem_limit_bytes=vmem_limit),
        cost_estimate=pl.CostEstimate(
            flops=flops,
            transcendentals=transcendentals,
            bytes_accessed=bytes_accessed),
    )(x2d, w1m, b1f, w2m, b2f, w3m, b3f, w4m, b4f)

    return out[:rows].reshape(-1, dim)


def init_params(key, dim, theta, dtype=jnp.float32):
    """Synthetic init matching nn.Linear fan-in bounds. Weights (in, out); biases (1, out)."""
    d0, d1, d2 = dim, dim + theta, dim + 2 * theta
    sizes = [(d0, d1), (d1, d2), (d2, d1), (d1, d0)]
    params = []
    for (fin, fout) in sizes:
        key, kw, kb = jax.random.split(key, 3)
        bound = 1.0 / jnp.sqrt(fin)
        w = jax.random.uniform(kw, (fin, fout), dtype, -bound, bound)
        b = jax.random.uniform(kb, (1, fout), dtype, -bound, bound)
        params.append((w, b))
    return params


def reference_forward(x, params, dim):
    x2d = x.reshape(-1, dim).astype(jnp.float32)
    (w1, b1), (w2, b2), (w3, b3), (w4, b4) = params
    h = jnp.tanh(x2d @ w1 + b1)
    z = h @ w2 + b2
    h = jnp.tanh(z @ w3 + b3)
    out = h @ w4 + b4
    return (out + x2d).reshape(-1, dim)


if __name__ == "__main__":
    dim, theta = 32, 16
    key = jax.random.PRNGKey(0)
    kx, kx2, kp = jax.random.split(key, 3)
    params = init_params(kp, dim, theta)

    # Case 1: tiny input shaped (2, 4, 32) -> flattened to (8, 32) rows.
    x_small = jax.random.normal(kx, (2, 4, dim), dtype=jnp.float32)
    out_small = jax.block_until_ready(
        res_autoencoder_forward(x_small, params, dim))
    ref_small = reference_forward(x_small, params, dim)
    assert out_small.shape == (8, dim)
    assert jnp.allclose(out_small, ref_small, atol=5e-2, rtol=5e-2), \
        "small-case mismatch vs reference"

    # Case 2: non-divisible row count -> exercises padding + multi-step grid.
    x_big = jax.random.normal(kx2, (1056, dim), dtype=jnp.float32)
    out_big = jax.block_until_ready(
        res_autoencoder_forward(x_big, params, dim, row_tile=512))
    ref_big = reference_forward(x_big, params, dim)
    assert out_big.shape == (1056, dim)
    assert jnp.allclose(out_big, ref_big, atol=5e-2, rtol=5e-2), \
        "large-case mismatch vs reference"

    print("KERNEL_OK")
</pallas_src>

<mosaic_0001>
module attributes {stable_mosaic.version = 11 : i64} {
  func.func @res_autoencoder_kernel(%arg0: i32, %arg1: memref<8x32xf32, #tpu.memory_space<vmem>>, %arg2: memref<32x48xbf16, #tpu.memory_space<vmem>>, %arg3: memref<1x48xf32, #tpu.memory_space<vmem>>, %arg4: memref<48x64xbf16, #tpu.memory_space<vmem>>, %arg5: memref<1x64xf32, #tpu.memory_space<vmem>>, %arg6: memref<64x48xbf16, #tpu.memory_space<vmem>>, %arg7: memref<1x48xf32, #tpu.memory_space<vmem>>, %arg8: memref<48x32xbf16, #tpu.memory_space<vmem>>, %arg9: memref<1x32xf32, #tpu.memory_space<vmem>>, %arg10: memref<8x32xf32, #tpu.memory_space<vmem>>) attributes {dimension_semantics = [#tpu.dimension_semantics<parallel>], iteration_bounds = array<i64: 1>, scalar_prefetch = 0 : i64, scratch_operands = 0 : i64, tpu.core_type = #tpu.core_type<tc>, window_params = [{transform_indices = @transform_0, window_bounds = array<i64: 8, 32>}, {pipeline_mode = #tpu.pipeline_mode<synchronous>, transform_indices = @transform_1, window_bounds = array<i64: 32, 48>}, {pipeline_mode = #tpu.pipeline_mode<synchronous>, transform_indices = @transform_2, window_bounds = array<i64: 1, 48>}, {pipeline_mode = #tpu.pipeline_mode<synchronous>, transform_indices = @transform_3, window_bounds = array<i64: 48, 64>}, {pipeline_mode = #tpu.pipeline_mode<synchronous>, transform_indices = @transform_4, window_bounds = array<i64: 1, 64>}, {pipeline_mode = #tpu.pipeline_mode<synchronous>, transform_indices = @transform_5, window_bounds = array<i64: 64, 48>}, {pipeline_mode = #tpu.pipeline_mode<synchronous>, transform_indices = @transform_6, window_bounds = array<i64: 1, 48>}, {pipeline_mode = #tpu.pipeline_mode<synchronous>, transform_indices = @transform_7, window_bounds = array<i64: 48, 32>}, {pipeline_mode = #tpu.pipeline_mode<synchronous>, transform_indices = @transform_8, window_bounds = array<i64: 1, 32>}, {transform_indices = @transform_9, window_bounds = array<i64: 8, 32>}]} {
    %c0 = arith.constant 0 : index
    %c0_0 = arith.constant 0 : index
    %0 = vector.load %arg1[%c0, %c0_0] : memref<8x32xf32, #tpu.memory_space<vmem>>, vector<8x32xf32>
    %1 = arith.truncf %0 : vector<8x32xf32> to vector<8x32xbf16>
    %c0_1 = arith.constant 0 : index
    %c0_2 = arith.constant 0 : index
    %2 = vector.load %arg2[%c0_1, %c0_2] : memref<32x48xbf16, #tpu.memory_space<vmem>>, vector<32x48xbf16>
    %cst = arith.constant dense<0.000000e+00> : vector<8x48xf32>
    %3 = tpu.matmul %1, %2, %cst {dimension_numbers = #tpu.dot_dimension_numbers<[1], [0], [0], [1], [0, 0, 1, 1], [], []>} : vector<8x32xbf16>, vector<32x48xbf16>, vector<8x48xf32> -> vector<8x48xf32>
    %c0_3 = arith.constant 0 : index
    %c0_4 = arith.constant 0 : index
    %4 = vector.load %arg3[%c0_3, %c0_4] : memref<1x48xf32, #tpu.memory_space<vmem>>, vector<1x48xf32>
    %5 = vector.broadcast %4 : vector<1x48xf32> to vector<8x48xf32>
    %6 = arith.addf %3, %5 : vector<8x48xf32>
    %7 = math.tanh %6 : vector<8x48xf32>
    %8 = arith.truncf %7 : vector<8x48xf32> to vector<8x48xbf16>
    %c0_5 = arith.constant 0 : index
    %c0_6 = arith.constant 0 : index
    %9 = vector.load %arg4[%c0_5, %c0_6] : memref<48x64xbf16, #tpu.memory_space<vmem>>, vector<48x64xbf16>
    %cst_7 = arith.constant dense<0.000000e+00> : vector<8x64xf32>
    %10 = tpu.matmul %8, %9, %cst_7 {dimension_numbers = #tpu.dot_dimension_numbers<[1], [0], [0], [1], [0, 0, 1, 1], [], []>} : vector<8x48xbf16>, vector<48x64xbf16>, vector<8x64xf32> -> vector<8x64xf32>
    %c0_8 = arith.constant 0 : index
    %c0_9 = arith.constant 0 : index
    %11 = vector.load %arg5[%c0_8, %c0_9] : memref<1x64xf32, #tpu.memory_space<vmem>>, vector<1x64xf32>
    %12 = vector.broadcast %11 : vector<1x64xf32> to vector<8x64xf32>
    %13 = arith.addf %10, %12 : vector<8x64xf32>
    %14 = arith.truncf %13 : vector<8x64xf32> to vector<8x64xbf16>
    %c0_10 = arith.constant 0 : index
    %c0_11 = arith.constant 0 : index
    %15 = vector.load %arg6[%c0_10, %c0_11] : memref<64x48xbf16, #tpu.memory_space<vmem>>, vector<64x48xbf16>
    %cst_12 = arith.constant dense<0.000000e+00> : vector<8x48xf32>
    %16 = tpu.matmul %14, %15, %cst_12 {dimension_numbers = #tpu.dot_dimension_numbers<[1], [0], [0], [1], [0, 0, 1, 1], [], []>} : vector<8x64xbf16>, vector<64x48xbf16>, vector<8x48xf32> -> vector<8x48xf32>
    %c0_13 = arith.constant 0 : index
    %c0_14 = arith.constant 0 : index
    %17 = vector.load %arg7[%c0_13, %c0_14] : memref<1x48xf32, #tpu.memory_space<vmem>>, vector<1x48xf32>
    %18 = vector.broadcast %17 : vector<1x48xf32> to vector<8x48xf32>
    %19 = arith.addf %16, %18 : vector<8x48xf32>
    %20 = math.tanh %19 : vector<8x48xf32>
    %21 = arith.truncf %20 : vector<8x48xf32> to vector<8x48xbf16>
    %c0_15 = arith.constant 0 : index
    %c0_16 = arith.constant 0 : index
    %22 = vector.load %arg8[%c0_15, %c0_16] : memref<48x32xbf16, #tpu.memory_space<vmem>>, vector<48x32xbf16>
    %cst_17 = arith.constant dense<0.000000e+00> : vector<8x32xf32>
    %23 = tpu.matmul %21, %22, %cst_17 {dimension_numbers = #tpu.dot_dimension_numbers<[1], [0], [0], [1], [0, 0, 1, 1], [], []>} : vector<8x48xbf16>, vector<48x32xbf16>, vector<8x32xf32> -> vector<8x32xf32>
    %c0_18 = arith.constant 0 : index
    %c0_19 = arith.constant 0 : index
    %24 = vector.load %arg9[%c0_18, %c0_19] : memref<1x32xf32, #tpu.memory_space<vmem>>, vector<1x32xf32>
    %25 = vector.broadcast %24 : vector<1x32xf32> to vector<8x32xf32>
    %26 = arith.addf %23, %25 : vector<8x32xf32>
    %27 = arith.addf %26, %0 : vector<8x32xf32>
    %c0_20 = arith.constant 0 : index
    %c0_21 = arith.constant 0 : index
    %28 = vector.load %arg10[%c0_20, %c0_21] : memref<8x32xf32, #tpu.memory_space<vmem>>, vector<8x32xf32>
    tpu.vector_store %arg10[%c0_20, %c0_21], %27 {strides = array<i32>} : memref<8x32xf32, #tpu.memory_space<vmem>>, vector<8x32xf32>,
    return
  }
  func.func @transform_0(%arg0: i32) -> (i32, i32) {
    %c0_i32 = arith.constant 0 : i32
    %c0_i32_0 = arith.constant 0 : i32
    return %arg0, %c0_i32 : i32, i32
  }
  func.func @transform_1(%arg0: i32) -> (i32, i32) {
    %c0_i32 = arith.constant 0 : i32
    %c0_i32_0 = arith.constant 0 : i32
    %c0_i32_1 = arith.constant 0 : i32
    return %c0_i32, %c0_i32_0 : i32, i32
  }
  func.func @transform_2(%arg0: i32) -> (i32, i32) {
    %c0_i32 = arith.constant 0 : i32
    %c0_i32_0 = arith.constant 0 : i32
    %c0_i32_1 = arith.constant 0 : i32
    return %c0_i32, %c0_i32_0 : i32, i32
  }
  func.func @transform_3(%arg0: i32) -> (i32, i32) {
    %c0_i32 = arith.constant 0 : i32
    %c0_i32_0 = arith.constant 0 : i32
    %c0_i32_1 = arith.constant 0 : i32
    return %c0_i32, %c0_i32_0 : i32, i32
  }
  func.func @transform_4(%arg0: i32) -> (i32, i32) {
    %c0_i32 = arith.constant 0 : i32
    %c0_i32_0 = arith.constant 0 : i32
    %c0_i32_1 = arith.constant 0 : i32
    return %c0_i32, %c0_i32_0 : i32, i32
  }
  func.func @transform_5(%arg0: i32) -> (i32, i32) {
    %c0_i32 = arith.constant 0 : i32
    %c0_i32_0 = arith.constant 0 : i32
    %c0_i32_1 = arith.constant 0 : i32
    return %c0_i32, %c0_i32_0 : i32, i32
  }
  func.func @transform_6(%arg0: i32) -> (i32, i32) {
    %c0_i32 = arith.constant 0 : i32
    %c0_i32_0 = arith.constant 0 : i32
    %c0_i32_1 = arith.constant 0 : i32
    return %c0_i32, %c0_i32_0 : i32, i32
  }
  func.func @transform_7(%arg0: i32) -> (i32, i32) {
    %c0_i32 = arith.constant 0 : i32
    %c0_i32_0 = arith.constant 0 : i32
    %c0_i32_1 = arith.constant 0 : i32
    return %c0_i32, %c0_i32_0 : i32, i32
  }
  func.func @transform_8(%arg0: i32) -> (i32, i32) {
    %c0_i32 = arith.constant 0 : i32
    %c0_i32_0 = arith.constant 0 : i32
    %c0_i32_1 = arith.constant 0 : i32
    return %c0_i32, %c0_i32_0 : i32, i32
  }
  func.func @transform_9(%arg0: i32) -> (i32, i32) {
    %c0_i32 = arith.constant 0 : i32
    %c0_i32_0 = arith.constant 0 : i32
    return %arg0, %c0_i32 : i32, i32
  }
}

</mosaic_0001>

<llo_original>
// kernel: tpu_custom_call.1
$region0: #{tpu_custom_call.1}
  #allocation0 [shape = 'u32[]', space=smem, size = 0x4, offset = 0x4, fixed_abs, tag = 'smem constant byte address 0x4 - core index']
  #allocation1 [shape = 'u32[144,128]{1,0:T(1,128)}', space=vmem, size = 0x12000, scoped, tag = 'internal scratch']
  %s0 = inlined_call_operand.vmem [shape: f32[8,32], index: 0, kind: input, shape index: {}]
  %s1 = inlined_call_operand.vmem [shape: bf16[32,48], index: 1, kind: input, shape index: {}]
  %s2 = inlined_call_operand.vmem [shape: f32[1,48], index: 2, kind: input, shape index: {}]
  %s3 = inlined_call_operand.vmem [shape: bf16[48,64], index: 3, kind: input, shape index: {}]
  %s4 = inlined_call_operand.vmem [shape: f32[1,64], index: 4, kind: input, shape index: {}]
  %s5 = inlined_call_operand.vmem [shape: bf16[64,48], index: 5, kind: input, shape index: {}]
  %s6 = inlined_call_operand.vmem [shape: f32[1,48], index: 6, kind: input, shape index: {}]
  %s7 = inlined_call_operand.vmem [shape: bf16[48,32], index: 7, kind: input, shape index: {}]
  %s8 = inlined_call_operand.vmem [shape: f32[1,32], index: 8, kind: input, shape index: {}]
  %s9 = inlined_call_operand.hbm [shape: f32[8,32], index: 9, kind: output, shape index: {}]
  %s10 = sld [smem:[#allocation0]]
  $region46: #{tpu_custom_call.1} parent=0
    _
  %s12 = ssub.s32 1, %s10
  %s13 = scalar_select 0, %s12, %s10
  $region1: #{tpu_custom_call.1} parent=0
    #allocation2 [shape = 'u8[4096]{0}', space=vmem, size = 0x1000, scoped, tag = 'output window, operand 0, single buffered']
    #allocation3 [shape = 's32[1]{0}', space=sflag, size = 0x4, scoped, tag = 'scoped memory for tpu_custom_call.1']
    %14 = vsyncpa [#allocation3], 0
    // Predicated region
    $region2: #{tpu_custom_call.1} parent=1 // pred_check
      _
    $region3: #{tpu_custom_call.1} parent=1 // pred_check_branch
      %16 = sbr.rel (0) target = $region5
    $region4: #{tpu_custom_call.1} parent=1 // pred_region
      _
    $region5: #{tpu_custom_call.1} parent=1 // pred_fallthru
      _
    // Predicated region
    $region6: #{tpu_custom_call.1} parent=1 // pred_check
      _
    $region7: #{tpu_custom_call.1} parent=1 // pred_check_branch
      %18 = sbr.rel (0) target = $region9
    $region8: #{tpu_custom_call.1} parent=1 // pred_region
      _
    $region9: #{tpu_custom_call.1} parent=1 // pred_fallthru
      _
    // Predicated region
    $region10: #{tpu_custom_call.1} parent=1 // pred_check
      _
    $region11: #{tpu_custom_call.1} parent=1 // pred_check_branch
      %20 = sbr.rel (0) target = $region13
    $region12: #{tpu_custom_call.1} parent=1 // pred_region
      _
    $region13: #{tpu_custom_call.1} parent=1 // pred_fallthru
      _
    // Predicated region
    $region14: #{tpu_custom_call.1} parent=1 // pred_check
      _
    $region15: #{tpu_custom_call.1} parent=1 // pred_check_branch
      %22 = sbr.rel (0) target = $region17
    $region16: #{tpu_custom_call.1} parent=1 // pred_region
      _
    $region17: #{tpu_custom_call.1} parent=1 // pred_fallthru
      _
    // Predicated region
    $region18: #{tpu_custom_call.1} parent=1 // pred_check
      _
    $region19: #{tpu_custom_call.1} parent=1 // pred_check_branch
      %24 = sbr.rel (0) target = $region21
    $region20: #{tpu_custom_call.1} parent=1 // pred_region
      _
    $region21: #{tpu_custom_call.1} parent=1 // pred_fallthru
      _
    // Predicated region
    $region22: #{tpu_custom_call.1} parent=1 // pred_check
      _
    $region23: #{tpu_custom_call.1} parent=1 // pred_check_branch
      %26 = sbr.rel (0) target = $region25
    $region24: #{tpu_custom_call.1} parent=1 // pred_region
      _
    $region25: #{tpu_custom_call.1} parent=1 // pred_fallthru
      _
    // Predicated region
    $region26: #{tpu_custom_call.1} parent=1 // pred_check
      _
    $region27: #{tpu_custom_call.1} parent=1 // pred_check_branch
      %28 = sbr.rel (0) target = $region29
    $region28: #{tpu_custom_call.1} parent=1 // pred_region
      _
    $region29: #{tpu_custom_call.1} parent=1 // pred_fallthru
      _
    // Predicated region
    $region30: #{tpu_custom_call.1} parent=1 // pred_check
      _
    $region31: #{tpu_custom_call.1} parent=1 // pred_check_branch
      %30 = sbr.rel (0) target = $region33
    $region32: #{tpu_custom_call.1} parent=1 // pred_region
      _
    $region33: #{tpu_custom_call.1} parent=1 // pred_fallthru
      _
    // Predicated region
    $region34: #{tpu_custom_call.1} parent=1 // pred_check
      _
    $region35: #{tpu_custom_call.1} parent=1 // pred_check_branch
      %32 = sbr.rel (0) target = $region37
    $region36: #{tpu_custom_call.1} parent=1 // pred_region
      _
    $region37: #{tpu_custom_call.1} parent=1 // pred_fallthru
      _
    %v34 = vld [vmem:[%s0] sm:$0xff]
    %v35 = vpack.c.bf16 %v34, %v34
    %v36 = vld [vmem:[%s1] sm:$0xf]
    %v37 = vld [vmem:[%s1 + $0x4] sm:$0xf]
    %v38 = vld [vmem:[%s1 + $0x8] sm:$0xf]
    %v39 = vld [vmem:[%s1 + $0xc] sm:$0xf]
    %v40 = vld [vmem:[%s2] sm:$0x1]
    %v42 = vlaneseq
    %v43 = vshrl.u32 %v42, 7
    %v44 = vsub.s32 0, %v43
    %v45 = vrot.slane %v40, %v44
    %v51 = vunpack.c.l.b16 %v36
    %v52 = vunpack.c.l.b16 %v37
    %v53 = vunpack.c.l.b16 %v38
    %v54 = vunpack.c.l.b16 %v39
    %v55 = vpack.c.b16 %v52, %v51
    %v56 = vpack.c.b16 %v54, %v53
    %vm59 = vcmask 261120
    %v61 = vsel %vm59, %v35, 0
    %63 = vmatprep.subr.bf16.mxu0 0
    %64 = vmatpush1.bf16.msra.mxu0 0
    %65 = vmatprep.subr.bf16.mxu0 0
    %66 = vmatpush1.bf16.msra.mxu0 0
    %67 = vmatprep.subr.bf16.mxu0 0
    %68 = vmatpush1.bf16.msra.mxu0 0
    %69 = vmatprep.subr.bf16.mxu0 0
    %70 = vmatpush1.bf16.msra.mxu0 0
    %71 = vmatprep.subr.bf16.mxu0 0
    %72 = vmatpush1.bf16.msra.mxu0 0
    %73 = vmatprep.subr.bf16.mxu0 0
    %74 = vmatpush1.bf16.msra.mxu0 0
    %75 = vmatprep.subr.bf16.mxu0 0
    %76 = vmatpush1.bf16.msra.mxu0 %v56
    %77 = vmatprep.subr.bf16.mxu0 0
    %78 = vmatpush1.bf16.msra.mxu0 %v55
    %79 = vmatprep.subr.bf16.mxu0 0
    %80 = vmatpush2.bf16.msra.mxu0 0
    %81 = vmatprep.subr.bf16.mxu0 0
    %82 = vmatpush2.bf16.msra.mxu0 0
    %83 = vmatprep.subr.bf16.mxu0 0
    %84 = vmatpush2.bf16.msra.mxu0 0
    %85 = vmatprep.subr.bf16.mxu0 0
    %86 = vmatpush2.bf16.msra.mxu0 0
    %87 = vmatprep.subr.bf16.mxu0 0
    %88 = vmatpush2.bf16.msra.mxu0 0
    %89 = vmatprep.subr.bf16.mxu0 0
    %90 = vmatpush2.bf16.msra.mxu0 0
    %91 = vmatprep.subr.bf16.mxu0 0
    %92 = vmatpush2.bf16.msra.mxu0 0
    %93 = vmatprep.subr.bf16.mxu0 0
    %94 = vmatpush2.bf16.msra.mxu0 0
    %95 = vmatprep.mubr.bf16.mxu0 0
    %96 = vmatmul.mubr.bf16.gmra.mxu0 %v61
    %v97 = vpop.f32.mrf.mxu0
    %v98 = vadd.f32 %v45, %v97
    %v99 = vpop.f32.mrf.mxu0
    %v100 = vpop.f32.mrf.mxu0
    %v101 = vpop.f32.mrf.mxu0
    %102 = vdwg.mxu0
    %v103 = vtanh.pop %v98
    %v104 = vpack.c.bf16 %v103, %v103
    %v105 = vld [vmem:[%s3] sm:$0xf]
    %v106 = vld [vmem:[%s3 + $0x4] sm:$0xf]
    %v107 = vld [vmem:[%s3 + $0x8] sm:$0xf]
    %v108 = vld [vmem:[%s3 + $0xc] sm:$0xf]
    %v109 = vld [vmem:[%s3 + $0x10] sm:$0xf]
    %v110 = vld [vmem:[%s3 + $0x14] sm:$0xf]
    %v111 = vld [vmem:[%s4] sm:$0x1]
    %v113 = vlaneseq
    %v114 = vshrl.u32 %v113, 7
    %v115 = vsub.s32 0, %v114
    %v116 = vrot.slane %v111, %v115
    %v124 = vunpack.c.l.b16 %v105
    %v125 = vunpack.c.l.b16 %v106
    %v126 = vunpack.c.l.b16 %v107
    %v127 = vunpack.c.l.b16 %v108
    %v128 = vunpack.c.l.b16 %v109
    %v129 = vunpack.c.l.b16 %v110
    %v130 = vpack.c.b16 %v125, %v124
    %v131 = vpack.c.b16 %v127, %v126
    %v132 = vpack.c.b16 %v129, %v128
    %vm136 = vcmask 392192
    %v138 = vsel %vm136, %v104, 0
    %140 = vmatprep.subr.bf16.mxu0 0
    %141 = vmatpush1.bf16.msra.mxu0 0
    %142 = vmatprep.subr.bf16.mxu0 0
    %143 = vmatpush1.bf16.msra.mxu0 0
    %144 = vmatprep.subr.bf16.mxu0 0
    %145 = vmatpush1.bf16.msra.mxu0 0
    %146 = vmatprep.subr.bf16.mxu0 0
    %147 = vmatpush1.bf16.msra.mxu0 0
    %148 = vmatprep.subr.bf16.mxu0 0
    %149 = vmatpush1.bf16.msra.mxu0 0
    %150 = vmatprep.subr.bf16.mxu0 0
    %151 = vmatpush1.bf16.msra.mxu0 %v132
    %152 = vmatprep.subr.bf16.mxu0 0
    %153 = vmatpush1.bf16.msra.mxu0 %v131
    %154 = vmatprep.subr.bf16.mxu0 0
    %155 = vmatpush1.bf16.msra.mxu0 %v130
    %156 = vmatprep.subr.bf16.mxu0 0
    %157 = vmatpush2.bf16.msra.mxu0 0
    %158 = vmatprep.subr.bf16.mxu0 0
    %159 = vmatpush2.bf16.msra.mxu0 0
    %160 = vmatprep.subr.bf16.mxu0 0
    %161 = vmatpush2.bf16.msra.mxu0 0
    %162 = vmatprep.subr.bf16.mxu0 0
    %163 = vmatpush2.bf16.msra.mxu0 0
    %164 = vmatprep.subr.bf16.mxu0 0
    %165 = vmatpush2.bf16.msra.mxu0 0
    %166 = vmatprep.subr.bf16.mxu0 0
    %167 = vmatpush2.bf16.msra.mxu0 0
    %168 = vmatprep.subr.bf16.mxu0 0
    %169 = vmatpush2.bf16.msra.mxu0 0
    %170 = vmatprep.subr.bf16.mxu0 0
    %171 = vmatpush2.bf16.msra.mxu0 0
    %172 = vmatprep.mubr.bf16.mxu0 0
    %173 = vmatmul.mubr.bf16.gmra.mxu0 %v138
    %v174 = vpop.f32.mrf.mxu0
    %v175 = vadd.f32 %v116, %v174
    %v176 = vpop.f32.mrf.mxu0
    %v177 = vpop.f32.mrf.mxu0
    %v178 = vpop.f32.mrf.mxu0
    %179 = vdwg.mxu0
    %v180 = vpack.c.bf16 %v175, %v175
    %v181 = vld [vmem:[%s5] sm:$0xf]
    %v182 = vld [vmem:[%s5 + $0x4] sm:$0xf]
    %v183 = vld [vmem:[%s5 + $0x8] sm:$0xf]
    %v184 = vld [vmem:[%s5 + $0xc] sm:$0xf]
    %v185 = vld [vmem:[%s5 + $0x10] sm:$0xf]
    %v186 = vld [vmem:[%s5 + $0x14] sm:$0xf]
    %v187 = vld [vmem:[%s5 + $0x18] sm:$0xf]
    %v188 = vld [vmem:[%s5 + $0x1c] sm:$0xf]
    %v189 = vld [vmem:[%s6] sm:$0x1]
    %v191 = vlaneseq
    %v192 = vshrl.u32 %v191, 7
    %v193 = vsub.s32 0, %v192
    %v194 = vrot.slane %v189, %v193
    %v204 = vunpack.c.l.b16 %v181
    %v205 = vunpack.c.l.b16 %v182
    %v206 = vunpack.c.l.b16 %v183
    %v207 = vunpack.c.l.b16 %v184
    %v208 = vunpack.c.l.b16 %v185
    %v209 = vunpack.c.l.b16 %v186
    %v210 = vunpack.c.l.b16 %v187
    %v211 = vunpack.c.l.b16 %v188
    %v212 = vpack.c.b16 %v205, %v204
    %v213 = vpack.c.b16 %v207, %v206
    %v214 = vpack.c.b16 %v209, %v208
    %v215 = vpack.c.b16 %v211, %v210
    %vm220 = vcmask 523264
    %v222 = vsel %vm220, %v180, 0
    %224 = vmatprep.subr.bf16.mxu0 0
    %225 = vmatpush1.bf16.msra.mxu0 0
    %226 = vmatprep.subr.bf16.mxu0 0
    %227 = vmatpush1.bf16.msra.mxu0 0
    %228 = vmatprep.subr.bf16.mxu0 0
    %229 = vmatpush1.bf16.msra.mxu0 0
    %230 = vmatprep.subr.bf16.mxu0 0
    %231 = vmatpush1.bf16.msra.mxu0 0
    %232 = vmatprep.subr.bf16.mxu0 0
    %233 = vmatpush1.bf16.msra.mxu0 %v215
    %234 = vmatprep.subr.bf16.mxu0 0
    %235 = vmatpush1.bf16.msra.mxu0 %v214
    %236 = vmatprep.subr.bf16.mxu0 0
    %237 = vmatpush1.bf16.msra.mxu0 %v213
    %238 = vmatprep.subr.bf16.mxu0 0
    %239 = vmatpush1.bf16.msra.mxu0 %v212
    %240 = vmatprep.subr.bf16.mxu0 0
    %241 = vmatpush2.bf16.msra.mxu0 0
    %242 = vmatprep.subr.bf16.mxu0 0
    %243 = vmatpush2.bf16.msra.mxu0 0
    %244 = vmatprep.subr.bf16.mxu0 0
    %245 = vmatpush2.bf16.msra.mxu0 0
    %246 = vmatprep.subr.bf16.mxu0 0
    %247 = vmatpush2.bf16.msra.mxu0 0
    %248 = vmatprep.subr.bf16.mxu0 0
    %249 = vmatpush2.bf16.msra.mxu0 0
    %250 = vmatprep.subr.bf16.mxu0 0
    %251 = vmatpush2.bf16.msra.mxu0 0
    %252 = vmatprep.subr.bf16.mxu0 0
    %253 = vmatpush2.bf16.msra.mxu0 0
    %254 = vmatprep.subr.bf16.mxu0 0
    %255 = vmatpush2.bf16.msra.mxu0 0
    %256 = vmatprep.mubr.bf16.mxu0 0
    %257 = vmatmul.mubr.bf16.gmra.mxu0 %v222
    %v258 = vpop.f32.mrf.mxu0
    %v259 = vadd.f32 %v194, %v258
    %v260 = vpop.f32.mrf.mxu0
    %v261 = vpop.f32.mrf.mxu0
    %v262 = vpop.f32.mrf.mxu0
    %263 = vdwg.mxu0
    %v264 = vtanh.pop %v259
    %v265 = vpack.c.bf16 %v264, %v264
    %v266 = vld [vmem:[%s7] sm:$0xf]
    %v267 = vld [vmem:[%s7 + $0x4] sm:$0xf]
    %v268 = vld [vmem:[%s7 + $0x8] sm:$0xf]
    %v269 = vld [vmem:[%s7 + $0xc] sm:$0xf]
    %v270 = vld [vmem:[%s7 + $0x10] sm:$0xf]
    %v271 = vld [vmem:[%s7 + $0x14] sm:$0xf]
    %v272 = vld [vmem:[%s8] sm:$0x1]
    %v274 = vlaneseq
    %v275 = vshrl.u32 %v274, 7
    %v276 = vsub.s32 0, %v275
    %v277 = vrot.slane %v272, %v276
    %v285 = vunpack.c.l.b16 %v266
    %v286 = vunpack.c.l.b16 %v267
    %v287 = vunpack.c.l.b16 %v268
    %v288 = vunpack.c.l.b16 %v269
    %v289 = vunpack.c.l.b16 %v270
    %v290 = vunpack.c.l.b16 %v271
    %v291 = vpack.c.b16 %v286, %v285
    %v292 = vpack.c.b16 %v288, %v287
    %v293 = vpack.c.b16 %v290, %v289
    %v298 = vsel %vm136, %v265, 0
    %300 = vmatprep.subr.bf16.mxu0 0
    %301 = vmatpush1.bf16.msra.mxu0 0
    %302 = vmatprep.subr.bf16.mxu0 0
    %303 = vmatpush1.bf16.msra.mxu0 0
    %304 = vmatprep.subr.bf16.mxu0 0
    %305 = vmatpush1.bf16.msra.mxu0 0
    %306 = vmatprep.subr.bf16.mxu0 0
    %307 = vmatpush1.bf16.msra.mxu0 0
    %308 = vmatprep.subr.bf16.mxu0 0
    %309 = vmatpush1.bf16.msra.mxu0 0
    %310 = vmatprep.subr.bf16.mxu0 0
    %311 = vmatpush1.bf16.msra.mxu0 %v293
    %312 = vmatprep.subr.bf16.mxu0 0
    %313 = vmatpush1.bf16.msra.mxu0 %v292
    %314 = vmatprep.subr.bf16.mxu0 0
    %315 = vmatpush1.bf16.msra.mxu0 %v291
    %316 = vmatprep.subr.bf16.mxu0 0
    %317 = vmatpush2.bf16.msra.mxu0 0
    %318 = vmatprep.subr.bf16.mxu0 0
    %319 = vmatpush2.bf16.msra.mxu0 0
    %320 = vmatprep.subr.bf16.mxu0 0
    %321 = vmatpush2.bf16.msra.mxu0 0
    %322 = vmatprep.subr.bf16.mxu0 0
    %323 = vmatpush2.bf16.msra.mxu0 0
    %324 = vmatprep.subr.bf16.mxu0 0
    %325 = vmatpush2.bf16.msra.mxu0 0
    %326 = vmatprep.subr.bf16.mxu0 0
    %327 = vmatpush2.bf16.msra.mxu0 0
    %328 = vmatprep.subr.bf16.mxu0 0
    %329 = vmatpush2.bf16.msra.mxu0 0
    %330 = vmatprep.subr.bf16.mxu0 0
    %331 = vmatpush2.bf16.msra.mxu0 0
    %332 = vmatprep.mubr.bf16.mxu0 0
    %333 = vmatmul.mubr.bf16.gmra.mxu0 %v298
    %v334 = vpop.f32.mrf.mxu0
    %v335 = vadd.f32 %v277, %v334
    %v336 = vpop.f32.mrf.mxu0
    %v337 = vpop.f32.mrf.mxu0
    %v338 = vpop.f32.mrf.mxu0
    %339 = vdwg.mxu0
    %v340 = vadd.f32 %v335, %v34
    %341 = vst.msk [vmem:[#allocation2] sm:$0xff] %vm59, %v340
    // Predicated region
    $region38: #{tpu_custom_call.1} parent=1 // pred_check
      _
    $region39: #{tpu_custom_call.1} parent=1 // pred_check_branch
      %343 = sbr.rel (0) target = $region41
    $region40: #{tpu_custom_call.1} parent=1 // pred_region
      %s345 = ssub.s32 128, 128
      %346 = vsyncadd [#allocation3], %s345
      %s348 = sshll.u32 [#allocation2], 4
      %s349 = int_to_ptr.vmem [resolvable:$true] %s348
      %351 = dma.vmem_to_hbm [thread:$0]  %s349, 128, %s9, [#allocation3]
    $region41: #{tpu_custom_call.1} parent=1 // pred_fallthru
      _
    // Predicated region
    $region42: #{tpu_custom_call.1} parent=1 // pred_check
      _
    $region43: #{tpu_custom_call.1} parent=1 // pred_check_branch
      %353 = sbr.rel (0) target = $region45
    $region44: #{tpu_custom_call.1} parent=1 // pred_region
      %354 = dma.done [#allocation3], 128
    $region45: #{tpu_custom_call.1} parent=1 // pred_fallthru
      _
    %355 = vsyncpa [#allocation3], 1

</llo_original>
